<compile_context>
chip_gen: v5e
topology: v5e:2x2
jax: 0.10.0
libtpu: 0.0.40
codegen_flags: <defaults>
</compile_context>

<pallas_src>
import math

import jax
import jax.numpy as jnp
from jax.experimental import pallas as pl
from jax.experimental.pallas import tpu as pltpu


_MAX_BLOCK_BYTES = 4 * 1024 * 1024   # per-input block; 2 in x 2 buf = 16 MiB (v7x-safe)
_MAX_TM = 4096                        # bounds accumulator scratch (3 x tm x 128 f32 <= 6 MiB)
_MAX_TD = 8192                        # bounds the unrolled lane-chunk loop (<= 64 chunks)


def _round_up(x, m):
    return ((x + m - 1) // m) * m


def _round_down(x, m):
    return (x // m) * m


def _choose_tiles(M, D, dt1, dt2):
    """Pick (tm, td): fill ~4 MiB per input block, then guarantee >=2 row tiles."""
    lane = 128
    isz = max(jnp.dtype(dt1).itemsize, jnp.dtype(dt2).itemsize)
    narrow = min(jnp.dtype(dt1).itemsize, jnp.dtype(dt2).itemsize)
    sub = 8 if narrow >= 4 else 16
    max_block_elems = _MAX_BLOCK_BYTES // isz
    d_phys = _round_up(D, lane)
    d_eff = min(d_phys, _MAX_TD)

    # Row tile: grow until the block budget is full (amortizes the ~0.35 us
    # per-grid-step overhead), bounded by the array and the scratch cap.
    tm = max(sub, _round_down(max_block_elems // d_eff, sub))
    tm = min(tm, _round_up(M, sub), _MAX_TM)

    # Then cap so the "parallel" row axis has >= 2 tiles (megacore / v7x),
    # preferring ~8 tiles as long as blocks stay >= ~1 MiB.
    if M > sub:
        one_mib_rows = max(sub, _round_down(((1 << 20) // isz) // d_eff, sub))
        tm8 = _round_up(pl.cdiv(M, 8), sub)
        tm2 = _round_up(pl.cdiv(M, 2), sub)
        cap = tm8 if (M >= 8 * sub and tm8 >= one_mib_rows) else tm2
        tm = min(tm, cap)

    # Column tile: collapse the reduction axis when a whole (padded) row fits.
    if d_phys <= _MAX_TD and tm * d_phys <= max_block_elems:
        return tm, D
    td = _round_down(max(max_block_elems // tm, lane), lane)
    td = min(td, _MAX_TD, d_phys)
    if td >= D:
        return tm, D
    return tm, td


def _make_sam_kernel(D, td):
    """Per-row dot / squared norms with lane-dense (tm,128) accumulators.

    Grid: (row_tiles, col_tiles); the column axis is the reduction
    ("arbitrary", last).  Writes A = dot * rsqrt(||x1||^2 * ||x2||^2)."""
    n_col_steps = pl.cdiv(D, td)
    rem = D - (n_col_steps - 1) * td      # valid width of the last column block
    has_tail = rem != td

    def _accum(x1_ref, x2_ref, dot_acc, n1_acc, n2_acc, width):
        # Accumulate 128-lane-aligned chunks: pure VPU work, no cross-lane
        # reduce in the steady-state loop.  `width` is static.
        c = 0
        while c < width:
            w = min(128, width - c)
            a = x1_ref[:, c:c + w].astype(jnp.float32)
            b = x2_ref[:, c:c + w].astype(jnp.float32)
            if w == 128:
                dot_acc[...] += a * b
                n1_acc[...] += a * a
                n2_acc[...] += b * b
            else:
                dot_acc[:, :w] += a * b
                n1_acc[:, :w] += a * a
                n2_acc[:, :w] += b * b
            c += w

    def kernel(x1_ref, x2_ref, a_ref, dot_acc, n1_acc, n2_acc):
        k = pl.program_id(1)

        @pl.when(k == 0)
        def _():
            dot_acc[...] = jnp.zeros_like(dot_acc)
            n1_acc[...] = jnp.zeros_like(n1_acc)
            n2_acc[...] = jnp.zeros_like(n2_acc)

        if has_tail:
            # Fast unmasked path for all full column blocks; the shorter
            # (static-width) accumulation runs only on the final partial block.
            @pl.when(k < n_col_steps - 1)
            def _():
                _accum(x1_ref, x2_ref, dot_acc, n1_acc, n2_acc, td)

            @pl.when(k == n_col_steps - 1)
            def _():
                _accum(x1_ref, x2_ref, dot_acc, n1_acc, n2_acc, rem)
        else:
            _accum(x1_ref, x2_ref, dot_acc, n1_acc, n2_acc, td)

        @pl.when(k == n_col_steps - 1)
        def _():
            # Single 128->1 cross-lane reduce per row tile, then one EUP rsqrt
            # + one mul instead of two sqrts and a divide.  (n1*n2 could
            # overflow f32 only for astronomically large norms.)
            dot = jnp.sum(dot_acc[...], axis=1, keepdims=True)
            n1 = jnp.sum(n1_acc[...], axis=1, keepdims=True)
            n2 = jnp.sum(n2_acc[...], axis=1, keepdims=True)
            a_ref[...] = (dot * jax.lax.rsqrt(n1 * n2)).astype(a_ref.dtype)

    return kernel


def sam_loss(pred, target, *, tm=None, td=None):
    B, N, H, W = pred.shape
    M = B * N
    D = H * W

    # Metadata-only reshapes; no HBM copy, no dtype upcast in the wrapper.
    x1 = pred.reshape(M, D)
    x2 = target.reshape(M, D)

    auto_tm, auto_td = _choose_tiles(M, D, x1.dtype, x2.dtype)
    tm = auto_tm if tm is None else tm
    td = auto_td if td is None else td

    grid = (pl.cdiv(M, tm), pl.cdiv(D, td))

    a = pl.pallas_call(
        _make_sam_kernel(D, td),
        out_shape=jax.ShapeDtypeStruct((M, 1), jnp.float32),
        grid_spec=pltpu.PrefetchScalarGridSpec(
            num_scalar_prefetch=0,
            grid=grid,
            in_specs=[
                pl.BlockSpec((tm, td), lambda i, k: (i, k)),
                pl.BlockSpec((tm, td), lambda i, k: (i, k)),
            ],
            out_specs=pl.BlockSpec((tm, 1), lambda i, k: (i, 0)),
            scratch_shapes=[
                pltpu.VMEM((tm, 128), jnp.float32),
                pltpu.VMEM((tm, 128), jnp.float32),
                pltpu.VMEM((tm, 128), jnp.float32),
            ],
        ),
        compiler_params=pltpu.CompilerParams(
            dimension_semantics=("parallel", "arbitrary"),
            # ~16 MiB double-buffered inputs + <= 6 MiB accumulator scratch +
            # temporaries; 40 MiB leaves headroom and stays within v7x's
            # 64 MiB physical VMEM (v5e's 16 MiB scoped default needs the raise).
            vmem_limit_bytes=40 * 1024 * 1024,
        ),
    )(x1, x2)

    a = a[:, 0]
    # Guard acos domain against f32 rounding (pred == target can give A just
    # above 1.0).  Torch would produce NaN here; we clamp instead.
    a = jnp.clip(a, -1.0, 1.0)
    # Tiny epilogue over M scalars; kept in XLA (Mosaic has no acos lowering).
    sam = jnp.arccos(a) * (180.0 / math.pi)
    return jnp.mean(sam)


def _sam_ref(pred, target):
    B, N = pred.shape[0], pred.shape[1]
    x1 = pred.reshape(B * N, -1).astype(jnp.float32)
    x2 = target.reshape(B * N, -1).astype(jnp.float32)
    A = jnp.sum(x1 * x2, axis=1) / (
        jnp.sqrt(jnp.sum(x1 ** 2, axis=1)) * jnp.sqrt(jnp.sum(x2 ** 2, axis=1))
    )
    return jnp.mean(jnp.arccos(A) * 180.0 / math.pi)


if __name__ == "__main__":
    key = jax.random.PRNGKey(0)
    k1, k2 = jax.random.split(key)

    # Case 1: shapes from the module spec (auto-tiled; reduction collapses to
    # a single column step per row tile).
    B, N, H, W = 2, 4, 16, 16
    # Positive-ish inputs keep acos well inside its domain.
    pred = jax.random.uniform(k1, (B, N, H, W), jnp.float32, 0.1, 1.0)
    target = jax.random.uniform(k2, (B, N, H, W), jnp.float32, 0.1, 1.0)

    loss = jax.jit(sam_loss)(pred, target)
    jax.block_until_ready(loss)
    ref = _sam_ref(pred, target)
    assert jnp.allclose(loss, ref, rtol=1e-5, atol=1e-5), (loss, ref)

    # Case 2: collapsed reduction with D = 272 (not a multiple of 128)
    # exercises the partial 128-lane chunk against the lane-dense accumulator.
    B2, N2, H2, W2 = 2, 4, 16, 17
    p2 = jax.random.uniform(k1, (B2, N2, H2, W2), jnp.float32, 0.1, 1.0)
    t2 = jax.random.uniform(k2, (B2, N2, H2, W2), jnp.float32, 0.1, 1.0)
    loss2 = jax.jit(sam_loss)(p2, t2)
    jax.block_until_ready(loss2)
    ref2 = _sam_ref(p2, t2)
    assert jnp.allclose(loss2, ref2, rtol=1e-5, atol=1e-5), (loss2, ref2)

    # Case 3: forced column tiling with a ragged column tail (D=272, td=128)
    # and a ragged row tail (M=15, tm=8) exercises the gated tail path and
    # out-of-bounds row handling.
    B3, N3, H3, W3 = 3, 5, 16, 17
    k3, k4 = jax.random.split(k2)
    p3 = jax.random.uniform(k3, (B3, N3, H3, W3), jnp.float32, 0.1, 1.0)
    t3 = jax.random.uniform(k4, (B3, N3, H3, W3), jnp.float32, 0.1, 1.0)
    loss3 = jax.jit(lambda a, b: sam_loss(a, b, tm=8, td=128))(p3, t3)
    jax.block_until_ready(loss3)
    ref3 = _sam_ref(p3, t3)
    assert jnp.allclose(loss3, ref3, rtol=1e-5, atol=1e-5), (loss3, ref3)

    print("KERNEL_OK")
</pallas_src>

<mosaic_0001>
module attributes {stable_mosaic.version = 11 : i64} {
  func.func @kernel(%arg0: i32, %arg1: i32, %arg2: memref<8x256xf32, #tpu.memory_space<vmem>>, %arg3: memref<8x256xf32, #tpu.memory_space<vmem>>, %arg4: memref<8x1xf32, #tpu.memory_space<vmem>>, %arg5: memref<8x128xf32, #tpu.memory_space<vmem>>, %arg6: memref<8x128xf32, #tpu.memory_space<vmem>>, %arg7: memref<8x128xf32, #tpu.memory_space<vmem>>) attributes {dimension_semantics = [#tpu.dimension_semantics<parallel>, #tpu.dimension_semantics<arbitrary>], iteration_bounds = array<i64: 1, 1>, scalar_prefetch = 0 : i64, scratch_operands = 3 : i64, tpu.core_type = #tpu.core_type<tc>, window_params = [{transform_indices = @transform_0, window_bounds = array<i64: 8, 256>}, {transform_indices = @transform_1, window_bounds = array<i64: 8, 256>}, {transform_indices = @transform_2, window_bounds = array<i64: 8, 1>}]} {
    %c0_i32 = arith.constant 0 : i32
    %0 = arith.cmpi eq, %arg1, %c0_i32 : i32
    %1 = arith.extui %0 : i1 to i32
    %c0_i32_0 = arith.constant 0 : i32
    %2 = arith.cmpi ne, %1, %c0_i32_0 : i32
    scf.if %2 {
      %cst = arith.constant 0.000000e+00 : f32
      %34 = vector.broadcast %cst : f32 to vector<8x128xf32>
      %c0_33 = arith.constant 0 : index
      %c0_34 = arith.constant 0 : index
      %35 = vector.load %arg5[%c0_33, %c0_34] : memref<8x128xf32, #tpu.memory_space<vmem>>, vector<8x128xf32>
      tpu.vector_store %arg5[%c0_33, %c0_34], %34 {strides = array<i32>} : memref<8x128xf32, #tpu.memory_space<vmem>>, vector<8x128xf32>,
      %cst_35 = arith.constant 0.000000e+00 : f32
      %36 = vector.broadcast %cst_35 : f32 to vector<8x128xf32>
      %c0_36 = arith.constant 0 : index
      %c0_37 = arith.constant 0 : index
      %37 = vector.load %arg6[%c0_36, %c0_37] : memref<8x128xf32, #tpu.memory_space<vmem>>, vector<8x128xf32>
      tpu.vector_store %arg6[%c0_36, %c0_37], %36 {strides = array<i32>} : memref<8x128xf32, #tpu.memory_space<vmem>>, vector<8x128xf32>,
      %cst_38 = arith.constant 0.000000e+00 : f32
      %38 = vector.broadcast %cst_38 : f32 to vector<8x128xf32>
      %c0_39 = arith.constant 0 : index
      %c0_40 = arith.constant 0 : index
      %39 = vector.load %arg7[%c0_39, %c0_40] : memref<8x128xf32, #tpu.memory_space<vmem>>, vector<8x128xf32>
      tpu.vector_store %arg7[%c0_39, %c0_40], %38 {strides = array<i32>} : memref<8x128xf32, #tpu.memory_space<vmem>>, vector<8x128xf32>,
    } else {
    }
    %c0 = arith.constant 0 : index
    %c0_1 = arith.constant 0 : index
    %3 = vector.load %arg2[%c0, %c0_1] : memref<8x256xf32, #tpu.memory_space<vmem>>, vector<8x128xf32>
    %c0_2 = arith.constant 0 : index
    %c0_3 = arith.constant 0 : index
    %4 = vector.load %arg3[%c0_2, %c0_3] : memref<8x256xf32, #tpu.memory_space<vmem>>, vector<8x128xf32>
    %c0_4 = arith.constant 0 : index
    %c0_5 = arith.constant 0 : index
    %5 = vector.load %arg5[%c0_4, %c0_5] : memref<8x128xf32, #tpu.memory_space<vmem>>, vector<8x128xf32>
    %6 = arith.mulf %3, %4 : vector<8x128xf32>
    %7 = arith.addf %5, %6 : vector<8x128xf32>
    %c0_6 = arith.constant 0 : index
    %c0_7 = arith.constant 0 : index
    %8 = vector.load %arg5[%c0_6, %c0_7] : memref<8x128xf32, #tpu.memory_space<vmem>>, vector<8x128xf32>
    tpu.vector_store %arg5[%c0_6, %c0_7], %7 {strides = array<i32>} : memref<8x128xf32, #tpu.memory_space<vmem>>, vector<8x128xf32>,
    %c0_8 = arith.constant 0 : index
    %c0_9 = arith.constant 0 : index
    %9 = vector.load %arg6[%c0_8, %c0_9] : memref<8x128xf32, #tpu.memory_space<vmem>>, vector<8x128xf32>
    %10 = arith.mulf %3, %3 : vector<8x128xf32>
    %11 = arith.addf %9, %10 : vector<8x128xf32>
    %c0_10 = arith.constant 0 : index
    %c0_11 = arith.constant 0 : index
    %12 = vector.load %arg6[%c0_10, %c0_11] : memref<8x128xf32, #tpu.memory_space<vmem>>, vector<8x128xf32>
    tpu.vector_store %arg6[%c0_10, %c0_11], %11 {strides = array<i32>} : memref<8x128xf32, #tpu.memory_space<vmem>>, vector<8x128xf32>,
    %c0_12 = arith.constant 0 : index
    %c0_13 = arith.constant 0 : index
    %13 = vector.load %arg7[%c0_12, %c0_13] : memref<8x128xf32, #tpu.memory_space<vmem>>, vector<8x128xf32>
    %14 = arith.mulf %4, %4 : vector<8x128xf32>
    %15 = arith.addf %13, %14 : vector<8x128xf32>
    %c0_14 = arith.constant 0 : index
    %c0_15 = arith.constant 0 : index
    %16 = vector.load %arg7[%c0_14, %c0_15] : memref<8x128xf32, #tpu.memory_space<vmem>>, vector<8x128xf32>
    tpu.vector_store %arg7[%c0_14, %c0_15], %15 {strides = array<i32>} : memref<8x128xf32, #tpu.memory_space<vmem>>, vector<8x128xf32>,
    %c0_16 = arith.constant 0 : index
    %c128 = arith.constant 128 : index
    %17 = vector.load %arg2[%c0_16, %c128] : memref<8x256xf32, #tpu.memory_space<vmem>>, vector<8x128xf32>
    %c0_17 = arith.constant 0 : index
    %c128_18 = arith.constant 128 : index
    %18 = vector.load %arg3[%c0_17, %c128_18] : memref<8x256xf32, #tpu.memory_space<vmem>>, vector<8x128xf32>
    %c0_19 = arith.constant 0 : index
    %c0_20 = arith.constant 0 : index
    %19 = vector.load %arg5[%c0_19, %c0_20] : memref<8x128xf32, #tpu.memory_space<vmem>>, vector<8x128xf32>
    %20 = arith.mulf %17, %18 : vector<8x128xf32>
    %21 = arith.addf %19, %20 : vector<8x128xf32>
    %c0_21 = arith.constant 0 : index
    %c0_22 = arith.constant 0 : index
    %22 = vector.load %arg5[%c0_21, %c0_22] : memref<8x128xf32, #tpu.memory_space<vmem>>, vector<8x128xf32>
    tpu.vector_store %arg5[%c0_21, %c0_22], %21 {strides = array<i32>} : memref<8x128xf32, #tpu.memory_space<vmem>>, vector<8x128xf32>,
    %c0_23 = arith.constant 0 : index
    %c0_24 = arith.constant 0 : index
    %23 = vector.load %arg6[%c0_23, %c0_24] : memref<8x128xf32, #tpu.memory_space<vmem>>, vector<8x128xf32>
    %24 = arith.mulf %17, %17 : vector<8x128xf32>
    %25 = arith.addf %23, %24 : vector<8x128xf32>
    %c0_25 = arith.constant 0 : index
    %c0_26 = arith.constant 0 : index
    %26 = vector.load %arg6[%c0_25, %c0_26] : memref<8x128xf32, #tpu.memory_space<vmem>>, vector<8x128xf32>
    tpu.vector_store %arg6[%c0_25, %c0_26], %25 {strides = array<i32>} : memref<8x128xf32, #tpu.memory_space<vmem>>, vector<8x128xf32>,
    %c0_27 = arith.constant 0 : index
    %c0_28 = arith.constant 0 : index
    %27 = vector.load %arg7[%c0_27, %c0_28] : memref<8x128xf32, #tpu.memory_space<vmem>>, vector<8x128xf32>
    %28 = arith.mulf %18, %18 : vector<8x128xf32>
    %29 = arith.addf %27, %28 : vector<8x128xf32>
    %c0_29 = arith.constant 0 : index
    %c0_30 = arith.constant 0 : index
    %30 = vector.load %arg7[%c0_29, %c0_30] : memref<8x128xf32, #tpu.memory_space<vmem>>, vector<8x128xf32>
    tpu.vector_store %arg7[%c0_29, %c0_30], %29 {strides = array<i32>} : memref<8x128xf32, #tpu.memory_space<vmem>>, vector<8x128xf32>,
    %c0_i32_31 = arith.constant 0 : i32
    %31 = arith.cmpi eq, %arg1, %c0_i32_31 : i32
    %32 = arith.extui %31 : i1 to i32
    %c0_i32_32 = arith.constant 0 : i32
    %33 = arith.cmpi ne, %32, %c0_i32_32 : i32
    scf.if %33 {
      %c0_33 = arith.constant 0 : index
      %c0_34 = arith.constant 0 : index
      %34 = vector.load %arg5[%c0_33, %c0_34] : memref<8x128xf32, #tpu.memory_space<vmem>>, vector<8x128xf32>
      %cst = arith.constant dense<0.000000e+00> : vector<8xf32>
      %35 = vector.multi_reduction <add>, %34, %cst [1] : vector<8x128xf32> to vector<8xf32>
      %36 = vector.shape_cast %35 : vector<8xf32> to vector<8x1xf32>
      %c0_35 = arith.constant 0 : index
      %c0_36 = arith.constant 0 : index
      %37 = vector.load %arg6[%c0_35, %c0_36] : memref<8x128xf32, #tpu.memory_space<vmem>>, vector<8x128xf32>
      %cst_37 = arith.constant dense<0.000000e+00> : vector<8xf32>
      %38 = vector.multi_reduction <add>, %37, %cst_37 [1] : vector<8x128xf32> to vector<8xf32>
      %39 = vector.shape_cast %38 : vector<8xf32> to vector<8x1xf32>
      %c0_38 = arith.constant 0 : index
      %c0_39 = arith.constant 0 : index
      %40 = vector.load %arg7[%c0_38, %c0_39] : memref<8x128xf32, #tpu.memory_space<vmem>>, vector<8x128xf32>
      %cst_40 = arith.constant dense<0.000000e+00> : vector<8xf32>
      %41 = vector.multi_reduction <add>, %40, %cst_40 [1] : vector<8x128xf32> to vector<8xf32>
      %42 = vector.shape_cast %41 : vector<8xf32> to vector<8x1xf32>
      %43 = arith.mulf %39, %42 : vector<8x1xf32>
      %44 = math.rsqrt %43 : vector<8x1xf32>
      %45 = arith.mulf %36, %44 : vector<8x1xf32>
      %c0_41 = arith.constant 0 : index
      %c0_42 = arith.constant 0 : index
      %46 = vector.load %arg4[%c0_41, %c0_42] : memref<8x1xf32, #tpu.memory_space<vmem>>, vector<8x1xf32>
      tpu.vector_store %arg4[%c0_41, %c0_42], %45 {strides = array<i32>} : memref<8x1xf32, #tpu.memory_space<vmem>>, vector<8x1xf32>,
    } else {
    }
    return
  }
  func.func @transform_0(%arg0: i32, %arg1: i32) -> (i32, i32) {
    %c0_i32 = arith.constant 0 : i32
    return %arg0, %arg1 : i32, i32
  }
  func.func @transform_1(%arg0: i32, %arg1: i32) -> (i32, i32) {
    %c0_i32 = arith.constant 0 : i32
    return %arg0, %arg1 : i32, i32
  }
  func.func @transform_2(%arg0: i32, %arg1: i32) -> (i32, i32) {
    %c0_i32 = arith.constant 0 : i32
    %c0_i32_0 = arith.constant 0 : i32
    return %arg0, %c0_i32 : i32, i32
  }
}

</mosaic_0001>

<llo_original>
// kernel: sam_loss.1
$region0: #{sam_loss.1}
  #allocation0 [shape = 'u32[]', space=smem, size = 0x4, offset = 0x4, fixed_abs, tag = 'smem constant byte address 0x4 - core index']
  #allocation1 [shape = 'u32[72,128]{1,0:T(1,128)}', space=vmem, size = 0x9000, scoped, tag = 'internal scratch']
  #allocation2 [shape = 'f32[8,128]{1,0:T(8,128)}', space=vmem, size = 0x1000, scoped, tag = 'scratch operand']
  #allocation3 [shape = 'f32[8,128]{1,0:T(8,128)}', space=vmem, size = 0x1000, scoped, tag = 'scratch operand']
  #allocation4 [shape = 'f32[8,128]{1,0:T(8,128)}', space=vmem, size = 0x1000, scoped, tag = 'scratch operand']
  %s0 = inlined_call_operand.vmem [shape: f32[8,256], index: 0, kind: input, shape index: {}]
  %s1 = inlined_call_operand.vmem [shape: f32[8,256], index: 1, kind: input, shape index: {}]
  %s2 = inlined_call_operand.vmem [shape: f32[8,1], index: 2, kind: output, shape index: {}]
  %s3 = sld [smem:[#allocation0]]
  $region26: #{sam_loss.1} parent=0
    _
  %s5 = ssub.s32 1, %s3
  %s6 = scalar_select 0, %s5, %s3
  // Predicated region
  $region2: #{sam_loss.1} parent=0 // pred_check
    _
  $region3: #{sam_loss.1} parent=0 // pred_check_branch
    %8 = sbr.rel (0) target = $region5
  $region4: #{sam_loss.1} parent=0 // pred_region
    _
  $region5: #{sam_loss.1} parent=0 // pred_fallthru
    _
  // Predicated region
  $region6: #{sam_loss.1} parent=0 // pred_check
    _
  $region7: #{sam_loss.1} parent=0 // pred_check_branch
    %10 = sbr.rel (0) target = $region9
  $region8: #{sam_loss.1} parent=0 // pred_region
    _
  $region9: #{sam_loss.1} parent=0 // pred_fallthru
    _
  %p11 = scmp.eq.s32.totalorder 0, 0
  // Predicated region
  $region10: #{sam_loss.1} parent=0 // pred_check
    %p12 = pneg %p11
  $region11: #{sam_loss.1} parent=0 // pred_check_branch
    %14 = sbr.rel (%p12) target = $region13
  $region12: #{sam_loss.1} parent=0 // pred_region
    %15 = vst [vmem:[#allocation2] sm:$0xff] 0.0
    %16 = vst [vmem:[#allocation3] sm:$0xff] 0.0
    %17 = vst [vmem:[#allocation4] sm:$0xff] 0.0
  $region13: #{sam_loss.1} parent=0 // pred_fallthru
    _
  %v18 = vld [vmem:[%s0] sm:$0xff]
  %v19 = vld [vmem:[%s1] sm:$0xff]
  %v20 = vld [vmem:[#allocation2] sm:$0xff]
  %v21 = vmul.f32 %v18, %v19
  %v22 = vadd.f32 %v20, %v21
  %23 = vst [vmem:[#allocation2] sm:$0xff] %v22
  %v24 = vld [vmem:[#allocation3] sm:$0xff]
  %v25 = vmul.f32 %v18, %v18
  %v26 = vadd.f32 %v24, %v25
  %27 = vst [vmem:[#allocation3] sm:$0xff] %v26
  %v28 = vld [vmem:[#allocation4] sm:$0xff]
  %v29 = vmul.f32 %v19, %v19
  %v30 = vadd.f32 %v28, %v29
  %31 = vst [vmem:[#allocation4] sm:$0xff] %v30
  %v32 = vld [vmem:[%s0 + $0x8] sm:$0xff]
  %v33 = vld [vmem:[%s1 + $0x8] sm:$0xff]
  %v34 = vld [vmem:[#allocation2] sm:$0xff]
  %v35 = vmul.f32 %v32, %v33
  %v36 = vadd.f32 %v34, %v35
  %37 = vst [vmem:[#allocation2] sm:$0xff] %v36
  %v38 = vld [vmem:[#allocation3] sm:$0xff]
  %v39 = vmul.f32 %v32, %v32
  %v40 = vadd.f32 %v38, %v39
  %41 = vst [vmem:[#allocation3] sm:$0xff] %v40
  %v42 = vld [vmem:[#allocation4] sm:$0xff]
  %v43 = vmul.f32 %v33, %v33
  %v44 = vadd.f32 %v42, %v43
  %45 = vst [vmem:[#allocation4] sm:$0xff] %v44
  // Predicated region
  $region14: #{sam_loss.1} parent=0 // pred_check
    %p46 = pneg %p11
  $region15: #{sam_loss.1} parent=0 // pred_check_branch
    %48 = sbr.rel (%p46) target = $region17
  $region16: #{sam_loss.1} parent=0 // pred_region
    %v49 = vld [vmem:[#allocation2] sm:$0xff]
    %50 = vadd.xlane.f32.xlu0 %v49
    %v51 = vpop.xlane.xlu0 %50
    %v52 = vld [vmem:[#allocation3] sm:$0xff]
    %53 = vadd.xlane.f32.xlu0 %v52
    %v54 = vpop.xlane.xlu0 %53
    %v55 = vld [vmem:[#allocation4] sm:$0xff]
    %56 = vadd.xlane.f32.xlu0 %v55
    %v57 = vpop.xlane.xlu0 %56
    %v58 = vmul.f32 %v54, %v57
    %v59 = vrsqrt.pop %v58
    %v60 = vmul.f32 %v59, %v58
    %v61 = vmul.f32 %v60, %v59
    %v62 = vmul.f32 0.5, %v61
    %v63 = vsub.f32 1.5, %v62
    %v64 = vmul.f32 %v59, %v63
    %vm65 = vweird.f32 %v58
    %vm66 = vweird.f32 %v59
    %vm67 = vmor %vm65, %vm66
    %v68 = vsel %vm67, %v59, %v64
    %v69 = vmul.f32 %v51, %v68
    %vm70 = vcmask 7168
    %71 = vst.msk [vmem:[%s2] sm:$0xff] %vm70, %v69
  $region17: #{sam_loss.1} parent=0 // pred_fallthru
    _
  // Predicated region
  $region18: #{sam_loss.1} parent=0 // pred_check
    _
  $region19: #{sam_loss.1} parent=0 // pred_check_branch
    %73 = sbr.rel (0) target = $region21
  $region20: #{sam_loss.1} parent=0 // pred_region
    _
  $region21: #{sam_loss.1} parent=0 // pred_fallthru
    _
  // Predicated region
  $region22: #{sam_loss.1} parent=0 // pred_check
    _
  $region23: #{sam_loss.1} parent=0 // pred_check_branch
    %75 = sbr.rel (0) target = $region25
  $region24: #{sam_loss.1} parent=0 // pred_region
    _
  $region25: #{sam_loss.1} parent=0 // pred_fallthru
    _

</llo_original>
